<compile_context>
chip_gen: v5e
topology: v5e:2x2
jax: 0.10.0
libtpu: 0.0.40
codegen_flags: <defaults>
</compile_context>

<pallas_src>
import math

import jax
import jax.numpy as jnp
from jax import lax
from jax.experimental import pallas as pl
from jax.experimental.pallas import tpu as pltpu


def _round_up(x: int, m: int) -> int:
    return ((x + m - 1) // m) * m


def _fixed_embedding_table(c_in: int, d_model: int) -> jnp.ndarray:
    """Deterministic sinusoidal table, identical to the PyTorch __init__."""
    position = jnp.arange(0, c_in, dtype=jnp.float32)[:, None]            # [c_in, 1]
    div_term = jnp.exp(
        jnp.arange(0, d_model, 2, dtype=jnp.float32)
        * -(math.log(10000.0) / d_model)
    )                                                                     # [d_model//2]
    w = jnp.zeros((c_in, d_model), dtype=jnp.float32)
    w = w.at[:, 0::2].set(jnp.sin(position * div_term))
    w = w.at[:, 1::2].set(jnp.cos(position * div_term))
    return w


def _embed_kernel(idx_ref, table_ref, out_ref):
    # idx_ref:   (TILE_M, 1)         int32   (rows already on sublanes, no reshape)
    # table_ref: (c_in_pad, d_pad)   table dtype (constant block across grid steps)
    # out_ref:   (TILE_M, d_pad)     table dtype (lane-dense: d_pad % 128 == 0)
    tile_m = idx_ref.shape[0]
    c_in_pad = table_ref.shape[0]

    idx = idx_ref[...]                                                    # [TILE_M, 1]
    iota_c = lax.broadcasted_iota(jnp.int32, (tile_m, c_in_pad), 1)       # [TILE_M, c_in_pad]
    onehot = (idx == iota_c).astype(table_ref.dtype)                      # [TILE_M, c_in_pad]
    # Note: an index outside [0, c_in) yields an all-zero one-hot row and thus a
    # silently-zero output row (same behavior as the original kernel).
    out_ref[...] = jnp.dot(
        onehot, table_ref[...], preferred_element_type=jnp.float32
    ).astype(out_ref.dtype)


def fixed_embedding(x: jnp.ndarray, table: jnp.ndarray, *, tile_m: int = 256) -> jnp.ndarray:
    """x: [B, L] integer indices; table: [c_in, d_model] -> [B, L, d_model]."""
    B, L = x.shape
    c_in, d_model = table.shape
    N = B * L

    # Layout plumbing done once in the wrapper (free): lane-dense output,
    # sublane-major indices, aligned table.
    d_pad = _round_up(d_model, 128)           # lane-dense output stores
    c_pad = _round_up(c_in, 8)                # sublane-aligned table rows
    tile_m = min(tile_m, _round_up(N, 8))     # don't over-pad tiny inputs
    n_pad = _round_up(N, tile_m)

    idx = jnp.zeros((n_pad, 1), dtype=jnp.int32)
    idx = idx.at[:N, 0].set(x.reshape(N).astype(jnp.int32))               # pad rows use index 0
    tbl = jnp.zeros((c_pad, d_pad), dtype=table.dtype)
    tbl = tbl.at[:c_in, :d_model].set(table)

    # NOTE: for this module c_in is tiny, so the full table plus the one-hot
    # intermediate fits VMEM comfortably even on v7x (64 MiB).  For a
    # large-vocab variant, add a trailing c_in grid axis marked "arbitrary"
    # with a f32 VMEM accumulator scratch and pl.when init/flush.
    itemsize = jnp.dtype(table.dtype).itemsize
    cost = pl.CostEstimate(
        flops=2 * n_pad * c_pad * d_pad,
        transcendentals=0,
        bytes_accessed=idx.size * 4
        + c_pad * d_pad * itemsize
        + n_pad * d_pad * itemsize,
    )

    out = pl.pallas_call(
        _embed_kernel,
        out_shape=jax.ShapeDtypeStruct((n_pad, d_pad), table.dtype),
        grid_spec=pltpu.PrefetchScalarGridSpec(
            num_scalar_prefetch=0,
            grid=(n_pad // tile_m,),
            in_specs=[
                pl.BlockSpec((tile_m, 1), lambda m: (m, 0)),     # index tile, sublane-major
                pl.BlockSpec((c_pad, d_pad), lambda m: (0, 0)),  # whole table (constant block)
            ],
            out_specs=pl.BlockSpec((tile_m, d_pad), lambda m: (m, 0)),
        ),
        compiler_params=pltpu.CompilerParams(
            # Row tiles are independent -> shardable across TensorCores (v7x megacore).
            dimension_semantics=("parallel",),
        ),
        cost_estimate=cost,
    )(idx, tbl)

    return out[:N, :d_model].reshape(B, L, d_model)


if __name__ == "__main__":
    # Small shapes consistent with the module's forward: integer index tensor
    # of shape [batch, seq], sinusoidal embedding table [c_in, d_model].
    B, L = 2, 8
    c_in, d_model = 16, 32

    key = jax.random.PRNGKey(0)
    x = jax.random.randint(key, (B, L), 0, c_in, dtype=jnp.int32)

    table = _fixed_embedding_table(c_in, d_model)

    out = fixed_embedding(x, table)
    out = jax.block_until_ready(out)

    # Reference check (plain JAX gather) to make sure semantics match.
    ref = jnp.take(table, x, axis=0)
    assert out.shape == (B, L, d_model)
    assert out.dtype == jnp.float32
    assert jnp.allclose(out, ref, atol=1e-6), "mismatch vs reference gather"

    print("KERNEL_OK")
</pallas_src>

<mosaic_0001>
module attributes {stable_mosaic.version = 11 : i64} {
  func.func @_embed_kernel(%arg0: i32, %arg1: memref<16x1xi32, #tpu.memory_space<vmem>>, %arg2: memref<16x128xf32, #tpu.memory_space<vmem>>, %arg3: memref<16x128xf32, #tpu.memory_space<vmem>>) attributes {dimension_semantics = [#tpu.dimension_semantics<parallel>], iteration_bounds = array<i64: 1>, scalar_prefetch = 0 : i64, scratch_operands = 0 : i64, tpu.core_type = #tpu.core_type<tc>, window_params = [{transform_indices = @transform_0, window_bounds = array<i64: 16, 1>}, {pipeline_mode = #tpu.pipeline_mode<synchronous>, transform_indices = @transform_1, window_bounds = array<i64: 16, 128>}, {transform_indices = @transform_2, window_bounds = array<i64: 16, 128>}]} {
    %c0 = arith.constant 0 : index
    %c0_0 = arith.constant 0 : index
    %0 = vector.load %arg1[%c0, %c0_0] : memref<16x1xi32, #tpu.memory_space<vmem>>, vector<16x1xi32>
    %1 = tpu.iota {dimensions = array<i32: 1>} : vector<16x16xi32>
    %2 = vector.broadcast %0 : vector<16x1xi32> to vector<16x16xi32>
    %3 = arith.cmpi eq, %2, %1 : vector<16x16xi32>
    %4 = arith.extui %3 : vector<16x16xi1> to vector<16x16xi32>
    %5 = arith.sitofp %4 : vector<16x16xi32> to vector<16x16xf32>
    %c0_1 = arith.constant 0 : index
    %c0_2 = arith.constant 0 : index
    %6 = vector.load %arg2[%c0_1, %c0_2] : memref<16x128xf32, #tpu.memory_space<vmem>>, vector<16x128xf32>
    %cst = arith.constant dense<0.000000e+00> : vector<16x128xf32>
    %7 = tpu.matmul %5, %6, %cst {dimension_numbers = #tpu.dot_dimension_numbers<[1], [0], [0], [1], [0, 0, 1, 1], [], []>} : vector<16x16xf32>, vector<16x128xf32>, vector<16x128xf32> -> vector<16x128xf32>
    %c0_3 = arith.constant 0 : index
    %c0_4 = arith.constant 0 : index
    %8 = vector.load %arg3[%c0_3, %c0_4] : memref<16x128xf32, #tpu.memory_space<vmem>>, vector<16x128xf32>
    tpu.vector_store %arg3[%c0_3, %c0_4], %7 {strides = array<i32>} : memref<16x128xf32, #tpu.memory_space<vmem>>, vector<16x128xf32>,
    return
  }
  func.func @transform_0(%arg0: i32) -> (i32, i32) {
    %c0_i32 = arith.constant 0 : i32
    %c0_i32_0 = arith.constant 0 : i32
    return %arg0, %c0_i32 : i32, i32
  }
  func.func @transform_1(%arg0: i32) -> (i32, i32) {
    %c0_i32 = arith.constant 0 : i32
    %c0_i32_0 = arith.constant 0 : i32
    %c0_i32_1 = arith.constant 0 : i32
    return %c0_i32, %c0_i32_0 : i32, i32
  }
  func.func @transform_2(%arg0: i32) -> (i32, i32) {
    %c0_i32 = arith.constant 0 : i32
    %c0_i32_0 = arith.constant 0 : i32
    return %arg0, %c0_i32 : i32, i32
  }
}

</mosaic_0001>

<llo_original>
// kernel: tpu_custom_call.1
$region0: #{tpu_custom_call.1}
  #allocation0 [shape = 'u32[]', space=smem, size = 0x4, offset = 0x4, fixed_abs, tag = 'smem constant byte address 0x4 - core index']
  #allocation1 [shape = 'u32[72,128]{1,0:T(1,128)}', space=vmem, size = 0x9000, scoped, tag = 'internal scratch']
  %s0 = inlined_call_operand.vmem [shape: s32[16,1], index: 0, kind: input, shape index: {}]
  %s1 = inlined_call_operand.vmem [shape: f32[16,128], index: 1, kind: input, shape index: {}]
  %s2 = inlined_call_operand.hbm [shape: f32[16,128], index: 2, kind: output, shape index: {}]
  %s3 = sld [smem:[#allocation0]]
  $region18: #{tpu_custom_call.1} parent=0
    _
  %s5 = ssub.s32 1, %s3
  %s6 = scalar_select 0, %s5, %s3
  $region1: #{tpu_custom_call.1} parent=0
    #allocation2 [shape = 'u8[8192]{0}', space=vmem, size = 0x2000, scoped, tag = 'output window, operand 0, single buffered']
    #allocation3 [shape = 's32[1]{0}', space=sflag, size = 0x4, scoped, tag = 'scoped memory for tpu_custom_call.1']
    %7 = vsyncpa [#allocation3], 0
    // Predicated region
    $region2: #{tpu_custom_call.1} parent=1 // pred_check
      _
    $region3: #{tpu_custom_call.1} parent=1 // pred_check_branch
      %9 = sbr.rel (0) target = $region5
    $region4: #{tpu_custom_call.1} parent=1 // pred_region
      _
    $region5: #{tpu_custom_call.1} parent=1 // pred_fallthru
      _
    // Predicated region
    $region6: #{tpu_custom_call.1} parent=1 // pred_check
      _
    $region7: #{tpu_custom_call.1} parent=1 // pred_check_branch
      %11 = sbr.rel (0) target = $region9
    $region8: #{tpu_custom_call.1} parent=1 // pred_region
      _
    $region9: #{tpu_custom_call.1} parent=1 // pred_fallthru
      _
    %v12 = vld [vmem:[%s0] sm:$0xff]
    %v13 = vld [vmem:[%s0 + $0x8] sm:$0xff]
    %v14 = vlaneseq
    %v15 = vand.u32 %v14, 127
    %16 = vset.pattern.permute.xlu0 0
    %17 = vperm.xlu0 %16, %v12
    %v18 = vpop.permute.xlu0 %17
    %19 = vset.pattern.permute.xlu0 0
    %20 = vperm.xlu0 %19, %v13
    %v21 = vpop.permute.xlu0 %20
    %vm22 = vcmp.eq.s32.totalorder %v18, %v15
    %vm23 = vcmp.eq.s32.totalorder %v21, %v15
    %v24 = vsel %vm22, 1, 0
    %v25 = vsel %vm23, 1, 0
    %v26 = vcvt.s32.f32 %v24
    %v27 = vcvt.s32.f32 %v25
    %v28 = vld [vmem:[%s1] sm:$0xff]
    %v29 = vld [vmem:[%s1 + $0x8] sm:$0xff]
    %vm30 = vcmask 130048
    %v32 = vsel %vm30, %v26, 0
    %v35 = vsel %vm30, %v27, 0
    %37 = vmatpush.msra.mxu0 0.0
    %38 = vmatpush.msra.mxu0 0.0
    %39 = vmatpush.msra.mxu0 0.0
    %40 = vmatpush.msra.mxu0 0.0
    %41 = vmatpush.msra.mxu0 0.0
    %42 = vmatpush.msra.mxu0 0.0
    %43 = vmatpush.msra.mxu0 0.0
    %44 = vmatpush.msra.mxu0 0.0
    %45 = vmatpush.msra.mxu0 0.0
    %46 = vmatpush.msra.mxu0 0.0
    %47 = vmatpush.msra.mxu0 0.0
    %48 = vmatpush.msra.mxu0 0.0
    %49 = vmatpush.msra.mxu0 0.0
    %50 = vmatpush.msra.mxu0 0.0
    %51 = vmatpush.msra.mxu0 %v29
    %52 = vmatpush.msra.mxu0 %v28
    %53 = vmatmul.f32.gmra.mxu0 %v32
    %v54 = vpop.f32.mrf.mxu0
    %v55 = vadd.f32 0.0, %v54
    %56 = vmatmul.f32.gmra.mxu0 %v35
    %v57 = vpop.f32.mrf.mxu0
    %v58 = vadd.f32 0.0, %v57
    %59 = vdwg.mxu0
    %60 = vst [vmem:[#allocation2] sm:$0xff] %v55
    %61 = vst [vmem:[#allocation2 + $0x8] sm:$0xff] %v58
    // Predicated region
    $region10: #{tpu_custom_call.1} parent=1 // pred_check
      _
    $region11: #{tpu_custom_call.1} parent=1 // pred_check_branch
      %63 = sbr.rel (0) target = $region13
    $region12: #{tpu_custom_call.1} parent=1 // pred_region
      %65 = vsyncadd [#allocation3], 0
      %s66 = sshll.u32 [#allocation2], 4
      %s67 = int_to_ptr.vmem [resolvable:$true] %s66
      %s68 = sshll.u32 %s2, 4
      %s69 = int_to_ptr.hbm [resolvable:$true] %s68
      %74 = dma.vmem_to_hbm [thread:$0]  %s67, 256, %s69, [#allocation3], 128, 128, 8
    $region13: #{tpu_custom_call.1} parent=1 // pred_fallthru
      _
    // Predicated region
    $region14: #{tpu_custom_call.1} parent=1 // pred_check
      _
    $region15: #{tpu_custom_call.1} parent=1 // pred_check_branch
      %76 = sbr.rel (0) target = $region17
    $region16: #{tpu_custom_call.1} parent=1 // pred_region
      %78 = dma.done [#allocation3], 256
    $region17: #{tpu_custom_call.1} parent=1 // pred_fallthru
      _
    %79 = vsyncpa [#allocation3], 1

</llo_original>
